<compile_context>
chip_gen: v6e
topology: v6e:2x2x1
jax: 0.10.0
libtpu: 0.0.40
codegen_flags: <defaults>
</compile_context>

<pallas_src>
import jax
import jax.numpy as jnp
from jax.experimental import pallas as pl
from jax.experimental.pallas import tpu as pltpu

N_NODES = 5          # graph has 5 nodes (indices 0..4)
IN_CH = 16           # embedding_size
HID_CH = 32          # GAT hidden_channels
HEADS = 2            # GAT heads (layer 1)
VOCAB = 20           # len(vocab) == output_size == GAT out_channels
RNN_HID = 128        # decoder hidden_size
NEG_SLOPE = 0.2      # GATConv leaky_relu default


def graph_to_sequence_kernel(
    x_ref, adj_ref,
    w1_ref, adst1_ref, asrc1_ref, b1_ref, w2_ref,
    vec20_ref, w_ih_ref, b_rnn_ref, fc_w_ref,
    out_logp_ref, out_hidden_ref,
):
  f32 = jnp.float32
  NT = (((1,), (1,)), ((), ()))        # contract last dims, no batch dims

  x = x_ref[...]                       # (N, 16) node features
  adj = adj_ref[...]                   # (N, N); adj[i, j] = 1 iff edge j -> i (self loops included)
  mask = adj > 0.0                     # hoisted once; reused by both GAT layers

  def masked_softmax(e):
    # e: (N, N) raw attention logits.  leaky_relu + per-row softmax over edges.
    e = jnp.where(e > 0, e, NEG_SLOPE * e)
    m = jnp.max(e, axis=1, keepdims=True)           # >= masked row max -> exp args <= 0, safe
    p = jnp.where(mask, jnp.exp(e - m), 0.0)        # single mask (non-edges exactly 0)
    return p / jnp.sum(p, axis=1, keepdims=True)

  # ---- GAT layer 1 (2 heads, concat=True), ReLU, and the layer-2 input transform -----------
  hh = jnp.dot(x, w1_ref[...], preferred_element_type=f32)        # (N, 64)  both heads at once
  u = jnp.dot(hh, adst1_ref[...], preferred_element_type=f32)     # (N, 2)   dst term per head
  s = jax.lax.dot_general(asrc1_ref[...], hh, NT,
                          preferred_element_type=f32)             # (2, N)   src term per head

  h2 = jnp.zeros((N_NODES, VOCAB), f32)
  for h in range(HEADS):
    a = masked_softmax(u[:, h:h + 1] + s[h:h + 1, :])             # (N, N)
    x1_h = jnp.dot(a, hh[:, h * HID_CH:(h + 1) * HID_CH],
                   preferred_element_type=f32) + b1_ref[pl.ds(h, 1), :]
    x1_h = jnp.maximum(x1_h, 0.0)                                 # ReLU between GAT layers
    h2 = h2 + jnp.dot(x1_h, w2_ref[h], preferred_element_type=f32)  # (N, 20)

  # ---- GAT layer 2 attention (1 head, concat=False => identity mean) -----------------------
  adst2 = vec20_ref[pl.ds(0, 1), :]                               # (1, 20)
  asrc2 = vec20_ref[pl.ds(1, 1), :]
  b2 = vec20_ref[pl.ds(2, 1), :]
  fc_b = vec20_ref[pl.ds(3, 1), :]

  u2 = jax.lax.dot_general(h2, adst2, NT, preferred_element_type=f32)   # (N, 1)
  s2 = jax.lax.dot_general(asrc2, h2, NT, preferred_element_type=f32)   # (1, N)
  a2 = masked_softmax(u2 + s2)
  x2 = jnp.dot(a2, h2, preferred_element_type=f32) + b2                 # (N, 20)

  # ---- global_mean_pool (batch=None -> single graph) ---------------------------------------
  pooled = jnp.sum(x2, axis=0, keepdims=True) * (1.0 / N_NODES)         # (1, 20)

  # ---- decoder: one nn.RNN(tanh) step with hidden=None (h0 == 0 => no w_hh dot) ------------
  h_rnn = jnp.tanh(jnp.dot(pooled, w_ih_ref[...], preferred_element_type=f32)
                   + b_rnn_ref[...])                                    # (1, 128)

  # Attention over a length-1 encoder sequence is identically 1.0 => context == h_rnn.
  logits = jnp.dot(h_rnn, fc_w_ref[...], preferred_element_type=f32) + fc_b   # (1, 20)
  m = jnp.max(logits, axis=1, keepdims=True)
  lse = m + jnp.log(jnp.sum(jnp.exp(logits - m), axis=1, keepdims=True))
  out_logp_ref[...] = logits - lse
  out_hidden_ref[...] = h_rnn


def graph_to_sequence(params, x, adj):
  # Host-side packing: fuse per-head weights, build block-diagonal attention vectors,
  # pre-add the two RNN biases, and stack the small (1, VOCAB) vectors so the kernel
  # takes 11 lane-dense inputs instead of 21 tiny ones.
  w1cat = jnp.concatenate([params["w1"][h] for h in range(HEADS)], axis=1)        # (16, 64)
  adst1_blk = jnp.zeros((HEADS * HID_CH, HEADS), jnp.float32)
  asrc1_blk = jnp.zeros((HEADS, HEADS * HID_CH), jnp.float32)
  for h in range(HEADS):
    adst1_blk = adst1_blk.at[h * HID_CH:(h + 1) * HID_CH, h].set(params["adst1"][h])
    asrc1_blk = asrc1_blk.at[h, h * HID_CH:(h + 1) * HID_CH].set(params["asrc1"][h])
  vec20 = jnp.stack([params["adst2"][0], params["asrc2"][0],
                     params["b2"][0], params["fc_b"][0]], axis=0)                 # (4, 20)
  b_rnn = params["b_ih"] + params["b_hh"]                                          # (1, 128)

  # NOTE: w_hh / h0 / attention-module weights are provably dead for this forward config
  # (hidden=None and encoder sequence length 1), so they are never sent to the kernel.
  args = (x, adj, w1cat, adst1_blk, asrc1_blk, params["b1"], params["w2"],
          vec20, params["w_ih"], b_rnn, params["fc_w"])

  # TODO(synk): if this op is ever called per-graph in a batch, add a leading batch grid
  # axis with dimension_semantics=("parallel",) to amortize launch/DMA cost and use both
  # TensorCores on v7x.
  vmem = lambda: pl.BlockSpec(memory_space=pltpu.MemorySpace.VMEM)
  logp, hidden = pl.pallas_call(
      graph_to_sequence_kernel,
      out_shape=(jax.ShapeDtypeStruct((1, VOCAB), jnp.float32),
                 jax.ShapeDtypeStruct((1, RNN_HID), jnp.float32)),
      in_specs=[vmem() for _ in args],
      out_specs=(vmem(), vmem()),
  )(*args)
  # Restore PyTorch shapes: output (1, vocab) log-probs, hidden (1, 1, hidden_size).
  return logp, hidden.reshape(1, 1, RNN_HID)


def build_adjacency(edge_index, n):
  # adj[i, j] = 1 iff there is a (source j -> target i) edge; GATConv adds self loops.
  src = edge_index[0]
  dst = edge_index[1]
  adj = jnp.zeros((n, n), jnp.float32)
  adj = adj.at[dst, src].set(1.0)
  diag = jnp.arange(n)
  adj = adj.at[diag, diag].set(1.0)
  return adj


def init_params(key):
  ks = jax.random.split(key, 18)
  s = 0.1
  p = {
      # GAT layer 1 (per-head weights stacked on axis 0)
      "w1": s * jax.random.normal(ks[0], (HEADS, IN_CH, HID_CH), jnp.float32),
      "asrc1": s * jax.random.normal(ks[1], (HEADS, HID_CH), jnp.float32),
      "adst1": s * jax.random.normal(ks[2], (HEADS, HID_CH), jnp.float32),
      "b1": s * jax.random.normal(ks[3], (HEADS, HID_CH), jnp.float32),     # split of the (64,) bias
      # GAT layer 2 (input 64 split per head-half, 1 head, concat=False)
      "w2": s * jax.random.normal(ks[4], (HEADS, HID_CH, VOCAB), jnp.float32),
      "asrc2": s * jax.random.normal(ks[5], (1, VOCAB), jnp.float32),
      "adst2": s * jax.random.normal(ks[6], (1, VOCAB), jnp.float32),
      "b2": s * jax.random.normal(ks[7], (1, VOCAB), jnp.float32),
      # nn.RNN (single step); weights pre-transposed
      "w_ih": s * jax.random.normal(ks[8], (VOCAB, RNN_HID), jnp.float32),
      "w_hh": s * jax.random.normal(ks[9], (RNN_HID, RNN_HID), jnp.float32),  # dead: h0 == 0
      "b_ih": s * jax.random.normal(ks[10], (1, RNN_HID), jnp.float32),
      "b_hh": s * jax.random.normal(ks[11], (1, RNN_HID), jnp.float32),
      "h0": jnp.zeros((1, RNN_HID), jnp.float32),                             # hidden=None -> zeros
      # Attention module (dead: seq_len == 1 => softmax == 1.0 exactly)
      "attn_wa": s * jax.random.normal(ks[12], (RNN_HID, RNN_HID), jnp.float32),
      "attn_wb": s * jax.random.normal(ks[13], (RNN_HID, RNN_HID), jnp.float32),
      "attn_b": s * jax.random.normal(ks[14], (1, RNN_HID), jnp.float32),
      "v": jax.random.uniform(ks[15], (1, RNN_HID), jnp.float32),
      # fc: Linear(hidden_size, output_size), pre-transposed
      "fc_w": s * jax.random.normal(ks[16], (RNN_HID, VOCAB), jnp.float32),
      "fc_b": s * jax.random.normal(ks[17], (1, VOCAB), jnp.float32),
  }
  return p


if __name__ == "__main__":
  key = jax.random.PRNGKey(0)
  k_emb, k_par = jax.random.split(key)

  # node_embeds(y) for y = [0,1,2,3,4]  -> deterministic N(0,1) embedding table rows
  x = jax.random.normal(k_emb, (N_NODES, IN_CH), jnp.float32)

  edge_index = jnp.array([[0, 0, 0, 0, 1, 3],
                          [1, 2, 3, 4, 2, 4]], dtype=jnp.int32)
  # edge_attr exists on the Data object but is never consumed by GATConv(x, edge_index).
  edge_attr = jnp.array([[0.1, 0.2], [0.3, 0.4], [0.3, 0.4],
                         [0.3, 0.4], [0.3, 0.4], [0.5, 0.6]], jnp.float32)  # unused, kept for parity

  adj = build_adjacency(edge_index, N_NODES)
  params = init_params(k_par)

  logp, hidden = graph_to_sequence(params, x, adj)
  jax.block_until_ready((logp, hidden))

  assert logp.shape == (1, VOCAB)
  assert hidden.shape == (1, 1, RNN_HID)
  # log-softmax sanity: probabilities sum to 1
  assert bool(jnp.abs(jnp.sum(jnp.exp(logp)) - 1.0) < 1e-4)
  assert bool(jnp.all(jnp.isfinite(logp))) and bool(jnp.all(jnp.isfinite(hidden)))

  print("KERNEL_OK")
</pallas_src>

<mosaic_0001>
module attributes {stable_mosaic.version = 11 : i64} {
  func.func @graph_to_sequence_kernel(%arg0: memref<5x16xf32, #tpu.memory_space<vmem>>, %arg1: memref<5x5xf32, #tpu.memory_space<vmem>>, %arg2: memref<16x64xf32, #tpu.memory_space<vmem>>, %arg3: memref<64x2xf32, #tpu.memory_space<vmem>>, %arg4: memref<2x64xf32, #tpu.memory_space<vmem>>, %arg5: memref<2x32xf32, #tpu.memory_space<vmem>>, %arg6: memref<2x32x20xf32, #tpu.memory_space<vmem>>, %arg7: memref<4x20xf32, #tpu.memory_space<vmem>>, %arg8: memref<20x128xf32, #tpu.memory_space<vmem>>, %arg9: memref<1x128xf32, #tpu.memory_space<vmem>>, %arg10: memref<128x20xf32, #tpu.memory_space<vmem>>, %arg11: memref<1x20xf32, #tpu.memory_space<vmem>>, %arg12: memref<1x128xf32, #tpu.memory_space<vmem>>) attributes {dimension_semantics = [], scalar_prefetch = 0 : i64, scratch_operands = 0 : i64, tpu.core_type = #tpu.core_type<tc>} {
    %c0 = arith.constant 0 : index
    %c0_0 = arith.constant 0 : index
    %0 = vector.load %arg0[%c0, %c0_0] : memref<5x16xf32, #tpu.memory_space<vmem>>, vector<5x16xf32>
    %c0_1 = arith.constant 0 : index
    %c0_2 = arith.constant 0 : index
    %1 = vector.load %arg1[%c0_1, %c0_2] : memref<5x5xf32, #tpu.memory_space<vmem>>, vector<5x5xf32>
    %cst = arith.constant 0.000000e+00 : f32
    %2 = vector.broadcast %cst : f32 to vector<5x5xf32>
    %3 = arith.cmpf ogt, %1, %2 : vector<5x5xf32>
    %c0_3 = arith.constant 0 : index
    %c0_4 = arith.constant 0 : index
    %4 = vector.load %arg2[%c0_3, %c0_4] : memref<16x64xf32, #tpu.memory_space<vmem>>, vector<16x64xf32>
    %cst_5 = arith.constant dense<0.000000e+00> : vector<5x64xf32>
    %5 = tpu.matmul %0, %4, %cst_5 {dimension_numbers = #tpu.dot_dimension_numbers<[1], [0], [0], [1], [0, 0, 1, 1], [], []>} : vector<5x16xf32>, vector<16x64xf32>, vector<5x64xf32> -> vector<5x64xf32>
    %c0_6 = arith.constant 0 : index
    %c0_7 = arith.constant 0 : index
    %6 = vector.load %arg3[%c0_6, %c0_7] : memref<64x2xf32, #tpu.memory_space<vmem>>, vector<64x2xf32>
    %cst_8 = arith.constant dense<0.000000e+00> : vector<5x2xf32>
    %7 = tpu.matmul %5, %6, %cst_8 {dimension_numbers = #tpu.dot_dimension_numbers<[1], [0], [0], [1], [0, 0, 1, 1], [], []>} : vector<5x64xf32>, vector<64x2xf32>, vector<5x2xf32> -> vector<5x2xf32>
    %c0_9 = arith.constant 0 : index
    %c0_10 = arith.constant 0 : index
    %8 = vector.load %arg4[%c0_9, %c0_10] : memref<2x64xf32, #tpu.memory_space<vmem>>, vector<2x64xf32>
    %cst_11 = arith.constant dense<0.000000e+00> : vector<2x5xf32>
    %9 = tpu.matmul %8, %5, %cst_11 {dimension_numbers = #tpu.dot_dimension_numbers<[1], [1], [0], [0], [0, 0, 1, 0], [], []>} : vector<2x64xf32>, vector<5x64xf32>, vector<2x5xf32> -> vector<2x5xf32>
    %cst_12 = arith.constant 0.000000e+00 : f32
    %10 = vector.broadcast %cst_12 : f32 to vector<5x20xf32>
    %11 = vector.extract_strided_slice %7 {offsets = [0, 0], sizes = [5, 1], strides = [1, 1]} : vector<5x2xf32> to vector<5x1xf32>
    %12 = vector.extract_strided_slice %9 {offsets = [0, 0], sizes = [1, 5], strides = [1, 1]} : vector<2x5xf32> to vector<1x5xf32>
    %13 = vector.broadcast %11 : vector<5x1xf32> to vector<5x5xf32>
    %14 = vector.broadcast %12 : vector<1x5xf32> to vector<5x5xf32>
    %15 = arith.addf %13, %14 : vector<5x5xf32>
    %cst_13 = arith.constant 0.000000e+00 : f32
    %16 = vector.broadcast %cst_13 : f32 to vector<5x5xf32>
    %17 = arith.cmpf ogt, %15, %16 : vector<5x5xf32>
    %cst_14 = arith.constant 2.000000e-01 : f32
    %18 = vector.broadcast %cst_14 : f32 to vector<5x5xf32>
    %19 = arith.mulf %18, %15 : vector<5x5xf32>
    %20 = arith.select %17, %15, %19 : vector<5x5xi1>, vector<5x5xf32>
    %cst_15 = arith.constant dense<0xFF800000> : vector<5xf32>
    %21 = vector.multi_reduction <maximumf>, %20, %cst_15 [1] : vector<5x5xf32> to vector<5xf32>
    %22 = vector.shape_cast %21 : vector<5xf32> to vector<5x1xf32>
    %23 = vector.broadcast %22 : vector<5x1xf32> to vector<5x5xf32>
    %24 = arith.subf %20, %23 : vector<5x5xf32>
    %25 = math.exp %24 : vector<5x5xf32>
    %cst_16 = arith.constant 0.000000e+00 : f32
    %26 = vector.broadcast %cst_16 : f32 to vector<5x5xf32>
    %27 = arith.select %3, %25, %26 : vector<5x5xi1>, vector<5x5xf32>
    %cst_17 = arith.constant dense<0.000000e+00> : vector<5xf32>
    %28 = vector.multi_reduction <add>, %27, %cst_17 [1] : vector<5x5xf32> to vector<5xf32>
    %29 = vector.shape_cast %28 : vector<5xf32> to vector<5x1xf32>
    %30 = vector.broadcast %29 : vector<5x1xf32> to vector<5x5xf32>
    %31 = arith.divf %27, %30 : vector<5x5xf32>
    %32 = vector.extract_strided_slice %5 {offsets = [0, 0], sizes = [5, 32], strides = [1, 1]} : vector<5x64xf32> to vector<5x32xf32>
    %cst_18 = arith.constant dense<0.000000e+00> : vector<5x32xf32>
    %33 = tpu.matmul %31, %32, %cst_18 {dimension_numbers = #tpu.dot_dimension_numbers<[1], [0], [0], [1], [0, 0, 1, 1], [], []>} : vector<5x5xf32>, vector<5x32xf32>, vector<5x32xf32> -> vector<5x32xf32>
    %c0_19 = arith.constant 0 : index
    %c0_20 = arith.constant 0 : index
    %34 = vector.load %arg5[%c0_19, %c0_20] : memref<2x32xf32, #tpu.memory_space<vmem>>, vector<1x32xf32>
    %35 = vector.broadcast %34 : vector<1x32xf32> to vector<5x32xf32>
    %36 = arith.addf %33, %35 : vector<5x32xf32>
    %cst_21 = arith.constant 0.000000e+00 : f32
    %37 = vector.broadcast %cst_21 : f32 to vector<5x32xf32>
    %38 = arith.maximumf %36, %37 : vector<5x32xf32>
    %c0_22 = arith.constant 0 : index
    %c0_23 = arith.constant 0 : index
    %c0_24 = arith.constant 0 : index
    %39 = vector.load %arg6[%c0_22, %c0_23, %c0_24] : memref<2x32x20xf32, #tpu.memory_space<vmem>>, vector<1x32x20xf32>
    %40 = vector.shape_cast %39 : vector<1x32x20xf32> to vector<32x20xf32>
    %cst_25 = arith.constant dense<0.000000e+00> : vector<5x20xf32>
    %41 = tpu.matmul %38, %40, %cst_25 {dimension_numbers = #tpu.dot_dimension_numbers<[1], [0], [0], [1], [0, 0, 1, 1], [], []>} : vector<5x32xf32>, vector<32x20xf32>, vector<5x20xf32> -> vector<5x20xf32>
    %42 = arith.addf %10, %41 : vector<5x20xf32>
    %43 = vector.extract_strided_slice %7 {offsets = [0, 1], sizes = [5, 1], strides = [1, 1]} : vector<5x2xf32> to vector<5x1xf32>
    %44 = vector.extract_strided_slice %9 {offsets = [1, 0], sizes = [1, 5], strides = [1, 1]} : vector<2x5xf32> to vector<1x5xf32>
    %45 = vector.broadcast %43 : vector<5x1xf32> to vector<5x5xf32>
    %46 = vector.broadcast %44 : vector<1x5xf32> to vector<5x5xf32>
    %47 = arith.addf %45, %46 : vector<5x5xf32>
    %cst_26 = arith.constant 0.000000e+00 : f32
    %48 = vector.broadcast %cst_26 : f32 to vector<5x5xf32>
    %49 = arith.cmpf ogt, %47, %48 : vector<5x5xf32>
    %cst_27 = arith.constant 2.000000e-01 : f32
    %50 = vector.broadcast %cst_27 : f32 to vector<5x5xf32>
    %51 = arith.mulf %50, %47 : vector<5x5xf32>
    %52 = arith.select %49, %47, %51 : vector<5x5xi1>, vector<5x5xf32>
    %cst_28 = arith.constant dense<0xFF800000> : vector<5xf32>
    %53 = vector.multi_reduction <maximumf>, %52, %cst_28 [1] : vector<5x5xf32> to vector<5xf32>
    %54 = vector.shape_cast %53 : vector<5xf32> to vector<5x1xf32>
    %55 = vector.broadcast %54 : vector<5x1xf32> to vector<5x5xf32>
    %56 = arith.subf %52, %55 : vector<5x5xf32>
    %57 = math.exp %56 : vector<5x5xf32>
    %cst_29 = arith.constant 0.000000e+00 : f32
    %58 = vector.broadcast %cst_29 : f32 to vector<5x5xf32>
    %59 = arith.select %3, %57, %58 : vector<5x5xi1>, vector<5x5xf32>
    %cst_30 = arith.constant dense<0.000000e+00> : vector<5xf32>
    %60 = vector.multi_reduction <add>, %59, %cst_30 [1] : vector<5x5xf32> to vector<5xf32>
    %61 = vector.shape_cast %60 : vector<5xf32> to vector<5x1xf32>
    %62 = vector.broadcast %61 : vector<5x1xf32> to vector<5x5xf32>
    %63 = arith.divf %59, %62 : vector<5x5xf32>
    %64 = vector.extract_strided_slice %5 {offsets = [0, 32], sizes = [5, 32], strides = [1, 1]} : vector<5x64xf32> to vector<5x32xf32>
    %cst_31 = arith.constant dense<0.000000e+00> : vector<5x32xf32>
    %65 = tpu.matmul %63, %64, %cst_31 {dimension_numbers = #tpu.dot_dimension_numbers<[1], [0], [0], [1], [0, 0, 1, 1], [], []>} : vector<5x5xf32>, vector<5x32xf32>, vector<5x32xf32> -> vector<5x32xf32>
    %c1 = arith.constant 1 : index
    %c0_32 = arith.constant 0 : index
    %66 = vector.load %arg5[%c1, %c0_32] : memref<2x32xf32, #tpu.memory_space<vmem>>, vector<1x32xf32>
    %67 = vector.broadcast %66 : vector<1x32xf32> to vector<5x32xf32>
    %68 = arith.addf %65, %67 : vector<5x32xf32>
    %cst_33 = arith.constant 0.000000e+00 : f32
    %69 = vector.broadcast %cst_33 : f32 to vector<5x32xf32>
    %70 = arith.maximumf %68, %69 : vector<5x32xf32>
    %c1_34 = arith.constant 1 : index
    %c0_35 = arith.constant 0 : index
    %c0_36 = arith.constant 0 : index
    %71 = vector.load %arg6[%c1_34, %c0_35, %c0_36] : memref<2x32x20xf32, #tpu.memory_space<vmem>>, vector<1x32x20xf32>
    %72 = vector.shape_cast %71 : vector<1x32x20xf32> to vector<32x20xf32>
    %cst_37 = arith.constant dense<0.000000e+00> : vector<5x20xf32>
    %73 = tpu.matmul %70, %72, %cst_37 {dimension_numbers = #tpu.dot_dimension_numbers<[1], [0], [0], [1], [0, 0, 1, 1], [], []>} : vector<5x32xf32>, vector<32x20xf32>, vector<5x20xf32> -> vector<5x20xf32>
    %74 = arith.addf %42, %73 : vector<5x20xf32>
    %c0_38 = arith.constant 0 : index
    %c0_39 = arith.constant 0 : index
    %75 = vector.load %arg7[%c0_38, %c0_39] : memref<4x20xf32, #tpu.memory_space<vmem>>, vector<1x20xf32>
    %c1_40 = arith.constant 1 : index
    %c0_41 = arith.constant 0 : index
    %76 = vector.load %arg7[%c1_40, %c0_41] : memref<4x20xf32, #tpu.memory_space<vmem>>, vector<1x20xf32>
    %c2 = arith.constant 2 : index
    %c0_42 = arith.constant 0 : index
    %77 = vector.load %arg7[%c2, %c0_42] : memref<4x20xf32, #tpu.memory_space<vmem>>, vector<1x20xf32>
    %c3 = arith.constant 3 : index
    %c0_43 = arith.constant 0 : index
    %78 = vector.load %arg7[%c3, %c0_43] : memref<4x20xf32, #tpu.memory_space<vmem>>, vector<1x20xf32>
    %cst_44 = arith.constant dense<0.000000e+00> : vector<5x1xf32>
    %79 = tpu.matmul %74, %75, %cst_44 {dimension_numbers = #tpu.dot_dimension_numbers<[1], [1], [0], [0], [0, 0, 1, 0], [], []>} : vector<5x20xf32>, vector<1x20xf32>, vector<5x1xf32> -> vector<5x1xf32>
    %cst_45 = arith.constant dense<0.000000e+00> : vector<1x5xf32>
    %80 = tpu.matmul %76, %74, %cst_45 {dimension_numbers = #tpu.dot_dimension_numbers<[1], [1], [0], [0], [0, 0, 1, 0], [], []>} : vector<1x20xf32>, vector<5x20xf32>, vector<1x5xf32> -> vector<1x5xf32>
    %81 = vector.broadcast %79 : vector<5x1xf32> to vector<5x5xf32>
    %82 = vector.broadcast %80 : vector<1x5xf32> to vector<5x5xf32>
    %83 = arith.addf %81, %82 : vector<5x5xf32>
    %cst_46 = arith.constant 0.000000e+00 : f32
    %84 = vector.broadcast %cst_46 : f32 to vector<5x5xf32>
    %85 = arith.cmpf ogt, %83, %84 : vector<5x5xf32>
    %cst_47 = arith.constant 2.000000e-01 : f32
    %86 = vector.broadcast %cst_47 : f32 to vector<5x5xf32>
    %87 = arith.mulf %86, %83 : vector<5x5xf32>
    %88 = arith.select %85, %83, %87 : vector<5x5xi1>, vector<5x5xf32>
    %cst_48 = arith.constant dense<0xFF800000> : vector<5xf32>
    %89 = vector.multi_reduction <maximumf>, %88, %cst_48 [1] : vector<5x5xf32> to vector<5xf32>
    %90 = vector.shape_cast %89 : vector<5xf32> to vector<5x1xf32>
    %91 = vector.broadcast %90 : vector<5x1xf32> to vector<5x5xf32>
    %92 = arith.subf %88, %91 : vector<5x5xf32>
    %93 = math.exp %92 : vector<5x5xf32>
    %cst_49 = arith.constant 0.000000e+00 : f32
    %94 = vector.broadcast %cst_49 : f32 to vector<5x5xf32>
    %95 = arith.select %3, %93, %94 : vector<5x5xi1>, vector<5x5xf32>
    %cst_50 = arith.constant dense<0.000000e+00> : vector<5xf32>
    %96 = vector.multi_reduction <add>, %95, %cst_50 [1] : vector<5x5xf32> to vector<5xf32>
    %97 = vector.shape_cast %96 : vector<5xf32> to vector<5x1xf32>
    %98 = vector.broadcast %97 : vector<5x1xf32> to vector<5x5xf32>
    %99 = arith.divf %95, %98 : vector<5x5xf32>
    %cst_51 = arith.constant dense<0.000000e+00> : vector<5x20xf32>
    %100 = tpu.matmul %99, %74, %cst_51 {dimension_numbers = #tpu.dot_dimension_numbers<[1], [0], [0], [1], [0, 0, 1, 1], [], []>} : vector<5x5xf32>, vector<5x20xf32>, vector<5x20xf32> -> vector<5x20xf32>
    %101 = vector.broadcast %77 : vector<1x20xf32> to vector<5x20xf32>
    %102 = arith.addf %100, %101 : vector<5x20xf32>
    %cst_52 = arith.constant dense<0.000000e+00> : vector<20xf32>
    %103 = vector.multi_reduction <add>, %102, %cst_52 [0] : vector<5x20xf32> to vector<20xf32>
    %104 = vector.shape_cast %103 : vector<20xf32> to vector<1x20xf32>
    %cst_53 = arith.constant 2.000000e-01 : f32
    %105 = vector.broadcast %cst_53 : f32 to vector<1x20xf32>
    %106 = arith.mulf %104, %105 : vector<1x20xf32>
    %c0_54 = arith.constant 0 : index
    %c0_55 = arith.constant 0 : index
    %107 = vector.load %arg8[%c0_54, %c0_55] : memref<20x128xf32, #tpu.memory_space<vmem>>, vector<20x128xf32>
    %cst_56 = arith.constant dense<0.000000e+00> : vector<1x128xf32>
    %108 = tpu.matmul %106, %107, %cst_56 {dimension_numbers = #tpu.dot_dimension_numbers<[1], [0], [0], [1], [0, 0, 1, 1], [], []>} : vector<1x20xf32>, vector<20x128xf32>, vector<1x128xf32> -> vector<1x128xf32>
    %c0_57 = arith.constant 0 : index
    %c0_58 = arith.constant 0 : index
    %109 = vector.load %arg9[%c0_57, %c0_58] : memref<1x128xf32, #tpu.memory_space<vmem>>, vector<1x128xf32>
    %110 = arith.addf %108, %109 : vector<1x128xf32>
    %111 = math.tanh %110 : vector<1x128xf32>
    %c0_59 = arith.constant 0 : index
    %c0_60 = arith.constant 0 : index
    %112 = vector.load %arg10[%c0_59, %c0_60] : memref<128x20xf32, #tpu.memory_space<vmem>>, vector<128x20xf32>
    %cst_61 = arith.constant dense<0.000000e+00> : vector<1x20xf32>
    %113 = tpu.matmul %111, %112, %cst_61 {dimension_numbers = #tpu.dot_dimension_numbers<[1], [0], [0], [1], [0, 0, 1, 1], [], []>} : vector<1x128xf32>, vector<128x20xf32>, vector<1x20xf32> -> vector<1x20xf32>
    %114 = arith.addf %113, %78 : vector<1x20xf32>
    %cst_62 = arith.constant dense<0xFF800000> : vector<1xf32>
    %115 = vector.multi_reduction <maximumf>, %114, %cst_62 [1] : vector<1x20xf32> to vector<1xf32>
    %116 = vector.shape_cast %115 : vector<1xf32> to vector<1x1xf32>
    %117 = vector.broadcast %116 : vector<1x1xf32> to vector<1x20xf32>
    %118 = arith.subf %114, %117 : vector<1x20xf32>
    %119 = math.exp %118 : vector<1x20xf32>
    %cst_63 = arith.constant dense<0.000000e+00> : vector<1xf32>
    %120 = vector.multi_reduction <add>, %119, %cst_63 [1] : vector<1x20xf32> to vector<1xf32>
    %121 = vector.shape_cast %120 : vector<1xf32> to vector<1x1xf32>
    %122 = math.log %121 : vector<1x1xf32>
    %123 = arith.addf %116, %122 : vector<1x1xf32>
    %124 = vector.broadcast %123 : vector<1x1xf32> to vector<1x20xf32>
    %125 = arith.subf %114, %124 : vector<1x20xf32>
    %c0_64 = arith.constant 0 : index
    %c0_65 = arith.constant 0 : index
    %126 = vector.load %arg11[%c0_64, %c0_65] : memref<1x20xf32, #tpu.memory_space<vmem>>, vector<1x20xf32>
    tpu.vector_store %arg11[%c0_64, %c0_65], %125 {strides = array<i32>} : memref<1x20xf32, #tpu.memory_space<vmem>>, vector<1x20xf32>,
    %c0_66 = arith.constant 0 : index
    %c0_67 = arith.constant 0 : index
    %127 = vector.load %arg12[%c0_66, %c0_67] : memref<1x128xf32, #tpu.memory_space<vmem>>, vector<1x128xf32>
    tpu.vector_store %arg12[%c0_66, %c0_67], %111 {strides = array<i32>} : memref<1x128xf32, #tpu.memory_space<vmem>>, vector<1x128xf32>,
    return
  }
}

</mosaic_0001>

<llo_original>
// kernel: tpu_custom_call.1
$region0: #{tpu_custom_call.1}
  #allocation0 [shape = 'u32[]', space=smem, size = 0x4, offset = 0x4, fixed_abs, tag = 'smem constant byte address 0x4 - core index']
  #allocation1 [shape = 'u32[144,128]{1,0:T(1,128)}', space=vmem, size = 0x12000, scoped, tag = 'internal scratch']
  %s0 = inlined_call_operand.vmem [shape: f32[5,16], index: 0, kind: input, shape index: {}]
  %s1 = inlined_call_operand.vmem [shape: f32[5,5], index: 1, kind: input, shape index: {}]
  %s2 = inlined_call_operand.vmem [shape: f32[16,64], index: 2, kind: input, shape index: {}]
  %s3 = inlined_call_operand.vmem [shape: f32[64,2], index: 3, kind: input, shape index: {}]
  %s4 = inlined_call_operand.vmem [shape: f32[2,64], index: 4, kind: input, shape index: {}]
  %s5 = inlined_call_operand.vmem [shape: f32[2,32], index: 5, kind: input, shape index: {}]
  %s6 = inlined_call_operand.vmem [shape: f32[2,32,20], index: 6, kind: input, shape index: {}]
  %s7 = inlined_call_operand.vmem [shape: f32[4,20], index: 7, kind: input, shape index: {}]
  %s8 = inlined_call_operand.vmem [shape: f32[20,128], index: 8, kind: input, shape index: {}]
  %s9 = inlined_call_operand.vmem [shape: f32[1,128], index: 9, kind: input, shape index: {}]
  %s10 = inlined_call_operand.vmem [shape: f32[128,20], index: 10, kind: input, shape index: {}]
  %s11 = inlined_call_operand.hbm [shape: f32[1,20], index: 11, kind: output, shape index: {0}]
  %s12 = inlined_call_operand.hbm [shape: f32[1,128], index: 12, kind: output, shape index: {1}]
  %13 = xla_tuple %s11, %s12
  %s14 = sld [smem:[#allocation0]]
  $region62: #{tpu_custom_call.1} parent=0
    _
  %s16 = ssub.s32 1, %s14
  %s17 = scalar_select 0, %s16, %s14
  $region1: #{tpu_custom_call.1} parent=0
    #allocation2 [shape = 'u8[512]{0}', space=vmem, size = 0x400, scoped, tag = 'output window, operand 0, single buffered']
    #allocation3 [shape = 's32[1]{0}', space=sflag, size = 0x4, scoped, tag = 'scoped memory for tpu_custom_call.1']
    #allocation4 [shape = 'u8[512]{0}', space=vmem, size = 0x400, scoped, tag = 'output window, operand 1, single buffered']
    #allocation5 [shape = 's32[1]{0}', space=sflag, size = 0x4, scoped, tag = 'scoped memory for tpu_custom_call.1']
    %18 = vsyncpa [#allocation3], 0
    %19 = vsyncpa [#allocation5], 0
    // Predicated region
    $region2: #{tpu_custom_call.1} parent=1 // pred_check
      _
    $region3: #{tpu_custom_call.1} parent=1 // pred_check_branch
      %21 = sbr.rel (0) target = $region5
    $region4: #{tpu_custom_call.1} parent=1 // pred_region
      _
    $region5: #{tpu_custom_call.1} parent=1 // pred_fallthru
      _
    // Predicated region
    $region6: #{tpu_custom_call.1} parent=1 // pred_check
      _
    $region7: #{tpu_custom_call.1} parent=1 // pred_check_branch
      %23 = sbr.rel (0) target = $region9
    $region8: #{tpu_custom_call.1} parent=1 // pred_region
      _
    $region9: #{tpu_custom_call.1} parent=1 // pred_fallthru
      _
    // Predicated region
    $region10: #{tpu_custom_call.1} parent=1 // pred_check
      _
    $region11: #{tpu_custom_call.1} parent=1 // pred_check_branch
      %25 = sbr.rel (0) target = $region13
    $region12: #{tpu_custom_call.1} parent=1 // pred_region
      _
    $region13: #{tpu_custom_call.1} parent=1 // pred_fallthru
      _
    // Predicated region
    $region14: #{tpu_custom_call.1} parent=1 // pred_check
      _
    $region15: #{tpu_custom_call.1} parent=1 // pred_check_branch
      %27 = sbr.rel (0) target = $region17
    $region16: #{tpu_custom_call.1} parent=1 // pred_region
      _
    $region17: #{tpu_custom_call.1} parent=1 // pred_fallthru
      _
    // Predicated region
    $region18: #{tpu_custom_call.1} parent=1 // pred_check
      _
    $region19: #{tpu_custom_call.1} parent=1 // pred_check_branch
      %29 = sbr.rel (0) target = $region21
    $region20: #{tpu_custom_call.1} parent=1 // pred_region
      _
    $region21: #{tpu_custom_call.1} parent=1 // pred_fallthru
      _
    // Predicated region
    $region22: #{tpu_custom_call.1} parent=1 // pred_check
      _
    $region23: #{tpu_custom_call.1} parent=1 // pred_check_branch
      %31 = sbr.rel (0) target = $region25
    $region24: #{tpu_custom_call.1} parent=1 // pred_region
      _
    $region25: #{tpu_custom_call.1} parent=1 // pred_fallthru
      _
    // Predicated region
    $region26: #{tpu_custom_call.1} parent=1 // pred_check
      _
    $region27: #{tpu_custom_call.1} parent=1 // pred_check_branch
      %33 = sbr.rel (0) target = $region29
    $region28: #{tpu_custom_call.1} parent=1 // pred_region
      _
    $region29: #{tpu_custom_call.1} parent=1 // pred_fallthru
      _
    // Predicated region
    $region30: #{tpu_custom_call.1} parent=1 // pred_check
      _
    $region31: #{tpu_custom_call.1} parent=1 // pred_check_branch
      %35 = sbr.rel (0) target = $region33
    $region32: #{tpu_custom_call.1} parent=1 // pred_region
      _
    $region33: #{tpu_custom_call.1} parent=1 // pred_fallthru
      _
    // Predicated region
    $region34: #{tpu_custom_call.1} parent=1 // pred_check
      _
    $region35: #{tpu_custom_call.1} parent=1 // pred_check_branch
      %37 = sbr.rel (0) target = $region37
    $region36: #{tpu_custom_call.1} parent=1 // pred_region
      _
    $region37: #{tpu_custom_call.1} parent=1 // pred_fallthru
      _
    // Predicated region
    $region38: #{tpu_custom_call.1} parent=1 // pred_check
      _
    $region39: #{tpu_custom_call.1} parent=1 // pred_check_branch
      %39 = sbr.rel (0) target = $region41
    $region40: #{tpu_custom_call.1} parent=1 // pred_region
      _
    $region41: #{tpu_custom_call.1} parent=1 // pred_fallthru
      _
    // Predicated region
    $region42: #{tpu_custom_call.1} parent=1 // pred_check
      _
    $region43: #{tpu_custom_call.1} parent=1 // pred_check_branch
      %41 = sbr.rel (0) target = $region45
    $region44: #{tpu_custom_call.1} parent=1 // pred_region
      _
    $region45: #{tpu_custom_call.1} parent=1 // pred_fallthru
      _
    %v42 = vld [vmem:[%s0] sm:$0x1f]
    %v43 = vld [vmem:[%s1] sm:$0x1f]
    %vm44 = vcmp.gt.f32.partialorder %v43, 0.0
    %v45 = vld [vmem:[%s2] sm:$0xff]
    %v46 = vld [vmem:[%s2 + $0x8] sm:$0xff]
    %vm47 = vcmask 130048
    %v49 = vsel %vm47, %v42, 0
    %51 = vmatprep.subr.mxu0 0.0
    %52 = vmatpush1.msra.mxu0 0.0
    %53 = vmatprep.subr.mxu0 0.0
    %54 = vmatpush1.msra.mxu0 0.0
    %55 = vmatprep.subr.mxu0 0.0
    %56 = vmatpush1.msra.mxu0 0.0
    %57 = vmatprep.subr.mxu0 0.0
    %58 = vmatpush1.msra.mxu0 0.0
    %59 = vmatprep.subr.mxu0 0.0
    %60 = vmatpush1.msra.mxu0 0.0
    %61 = vmatprep.subr.mxu0 0.0
    %62 = vmatpush1.msra.mxu0 0.0
    %63 = vmatprep.subr.mxu0 0.0
    %64 = vmatpush1.msra.mxu0 0.0
    %65 = vmatprep.subr.mxu0 0.0
    %66 = vmatpush1.msra.mxu0 0.0
    %67 = vmatprep.subr.mxu0 0.0
    %68 = vmatpush1.msra.mxu0 0.0
    %69 = vmatprep.subr.mxu0 0.0
    %70 = vmatpush1.msra.mxu0 0.0
    %71 = vmatprep.subr.mxu0 0.0
    %72 = vmatpush1.msra.mxu0 0.0
    %73 = vmatprep.subr.mxu0 0.0
    %74 = vmatpush1.msra.mxu0 0.0
    %75 = vmatprep.subr.mxu0 0.0
    %76 = vmatpush1.msra.mxu0 0.0
    %77 = vmatprep.subr.mxu0 0.0
    %78 = vmatpush1.msra.mxu0 0.0
    %79 = vmatprep.subr.mxu0 0.0
    %80 = vmatpush1.msra.mxu0 %v46
    %81 = vmatprep.subr.mxu0 0.0
    %82 = vmatpush1.msra.mxu0 %v45
    %83 = vmatprep.subr.mxu0 0.0
    %84 = vmatpush2.msra.mxu0 0.0
    %85 = vmatprep.subr.mxu0 0.0
    %86 = vmatpush2.msra.mxu0 0.0
    %87 = vmatprep.subr.mxu0 0.0
    %88 = vmatpush2.msra.mxu0 0.0
    %89 = vmatprep.subr.mxu0 0.0
    %90 = vmatpush2.msra.mxu0 0.0
    %91 = vmatprep.subr.mxu0 0.0
    %92 = vmatpush2.msra.mxu0 0.0
    %93 = vmatprep.subr.mxu0 0.0
    %94 = vmatpush2.msra.mxu0 0.0
    %95 = vmatprep.subr.mxu0 0.0
    %96 = vmatpush2.msra.mxu0 0.0
    %97 = vmatprep.subr.mxu0 0.0
    %98 = vmatpush2.msra.mxu0 0.0
    %99 = vmatprep.subr.mxu0 0.0
    %100 = vmatpush2.msra.mxu0 0.0
    %101 = vmatprep.subr.mxu0 0.0
    %102 = vmatpush2.msra.mxu0 0.0
    %103 = vmatprep.subr.mxu0 0.0
    %104 = vmatpush2.msra.mxu0 0.0
    %105 = vmatprep.subr.mxu0 0.0
    %106 = vmatpush2.msra.mxu0 0.0
    %107 = vmatprep.subr.mxu0 0.0
    %108 = vmatpush2.msra.mxu0 0.0
    %109 = vmatprep.subr.mxu0 0.0
    %110 = vmatpush2.msra.mxu0 0.0
    %111 = vmatprep.subr.mxu0 0.0
    %112 = vmatpush2.msra.mxu0 0.0
    %113 = vmatprep.subr.mxu0 0.0
    %114 = vmatpush2.msra.mxu0 0.0
    %115 = vmatprep.mubr.f32.mxu0 0.0
    %116 = vmatmul.mubr.f32.gmra.mxu0 %v49
    %v117 = vpop.f32.mrf.mxu0
    %v118 = vadd.f32 0.0, %v117
    %v119 = vpop.f32.mrf.mxu0
    %120 = vdwg.mxu0
    %v121 = vld [vmem:[%s3] sm:$0xff]
    %v122 = vld [vmem:[%s3 + $0x8] sm:$0xff]
    %v123 = vld [vmem:[%s3 + $0x10] sm:$0xff]
    %v124 = vld [vmem:[%s3 + $0x18] sm:$0xff]
    %v125 = vld [vmem:[%s3 + $0x20] sm:$0xff]
    %v126 = vld [vmem:[%s3 + $0x28] sm:$0xff]
    %v127 = vld [vmem:[%s3 + $0x30] sm:$0xff]
    %v128 = vld [vmem:[%s3 + $0x38] sm:$0xff]
    %vm129 = vcmask 523264
    %v131 = vsel %vm129, %v118, 0
    %133 = vmatprep.subr.mxu0 0.0
    %134 = vmatpush1.msra.mxu0 0.0
    %135 = vmatprep.subr.mxu0 0.0
    %136 = vmatpush1.msra.mxu0 0.0
    %137 = vmatprep.subr.mxu0 0.0
    %138 = vmatpush1.msra.mxu0 0.0
    %139 = vmatprep.subr.mxu0 0.0
    %140 = vmatpush1.msra.mxu0 0.0
    %141 = vmatprep.subr.mxu0 0.0
    %142 = vmatpush1.msra.mxu0 0.0
    %143 = vmatprep.subr.mxu0 0.0
    %144 = vmatpush1.msra.mxu0 0.0
    %145 = vmatprep.subr.mxu0 0.0
    %146 = vmatpush1.msra.mxu0 0.0
    %147 = vmatprep.subr.mxu0 0.0
    %148 = vmatpush1.msra.mxu0 0.0
    %149 = vmatprep.subr.mxu0 0.0
    %150 = vmatpush1.msra.mxu0 %v128
    %151 = vmatprep.subr.mxu0 0.0
    %152 = vmatpush1.msra.mxu0 %v127
    %153 = vmatprep.subr.mxu0 0.0
    %154 = vmatpush1.msra.mxu0 %v126
    %155 = vmatprep.subr.mxu0 0.0
    %156 = vmatpush1.msra.mxu0 %v125
    %157 = vmatprep.subr.mxu0 0.0
    %158 = vmatpush1.msra.mxu0 %v124
    %159 = vmatprep.subr.mxu0 0.0
    %160 = vmatpush1.msra.mxu0 %v123
    %161 = vmatprep.subr.mxu0 0.0
    %162 = vmatpush1.msra.mxu0 %v122
    %163 = vmatprep.subr.mxu0 0.0
    %164 = vmatpush1.msra.mxu0 %v121
    %165 = vmatprep.subr.mxu0 0.0
    %166 = vmatpush2.msra.mxu0 0.0
    %167 = vmatprep.subr.mxu0 0.0
    %168 = vmatpush2.msra.mxu0 0.0
    %169 = vmatprep.subr.mxu0 0.0
    %170 = vmatpush2.msra.mxu0 0.0
    %171 = vmatprep.subr.mxu0 0.0
    %172 = vmatpush2.msra.mxu0 0.0
    %173 = vmatprep.subr.mxu0 0.0
    %174 = vmatpush2.msra.mxu0 0.0
    %175 = vmatprep.subr.mxu0 0.0
    %176 = vmatpush2.msra.mxu0 0.0
    %177 = vmatprep.subr.mxu0 0.0
    %178 = vmatpush2.msra.mxu0 0.0
    %179 = vmatprep.subr.mxu0 0.0
    %180 = vmatpush2.msra.mxu0 0.0
    %181 = vmatprep.subr.mxu0 0.0
    %182 = vmatpush2.msra.mxu0 0.0
    %183 = vmatprep.subr.mxu0 0.0
    %184 = vmatpush2.msra.mxu0 0.0
    %185 = vmatprep.subr.mxu0 0.0
    %186 = vmatpush2.msra.mxu0 0.0
    %187 = vmatprep.subr.mxu0 0.0
    %188 = vmatpush2.msra.mxu0 0.0
    %189 = vmatprep.subr.mxu0 0.0
    %190 = vmatpush2.msra.mxu0 0.0
    %191 = vmatprep.subr.mxu0 0.0
    %192 = vmatpush2.msra.mxu0 0.0
    %193 = vmatprep.subr.mxu0 0.0
    %194 = vmatpush2.msra.mxu0 0.0
    %195 = vmatprep.subr.mxu0 0.0
    %196 = vmatpush2.msra.mxu0 0.0
    %197 = vmatprep.mubr.f32.mxu0 0.0
    %198 = vmatmul.mubr.f32.gmra.mxu0 %v131
    %v199 = vpop.f32.mrf.mxu0
    %v200 = vadd.f32 0.0, %v199
    %v201 = vpop.f32.mrf.mxu0
    %202 = vdwg.mxu0
    %v203 = vld [vmem:[%s4] sm:$0x3]
    %v205 = vsel %vm129, %v203, 0
    %207 = vmatprep.subr.mxu0 0.0
    %208 = vmatpush1.xpose.msra.mxu0 0.0
    %209 = vmatprep.subr.mxu0 0.0
    %210 = vmatpush1.xpose.msra.mxu0 0.0
    %211 = vmatprep.subr.mxu0 0.0
    %212 = vmatpush1.xpose.msra.mxu0 0.0
    %213 = vmatprep.subr.mxu0 0.0
    %214 = vmatpush1.xpose.msra.mxu0 0.0
    %215 = vmatprep.subr.mxu0 0.0
    %216 = vmatpush1.xpose.msra.mxu0 0.0
    %217 = vmatprep.subr.mxu0 0.0
    %218 = vmatpush1.xpose.msra.mxu0 0.0
    %219 = vmatprep.subr.mxu0 0.0
    %220 = vmatpush1.xpose.msra.mxu0 0.0
    %221 = vmatprep.subr.mxu0 0.0
    %222 = vmatpush1.xpose.msra.mxu0 0.0
    %223 = vmatprep.subr.mxu0 0.0
    %224 = vmatpush1.xpose.msra.mxu0 0.0
    %225 = vmatprep.subr.mxu0 0.0
    %226 = vmatpush1.xpose.msra.mxu0 0.0
    %227 = vmatprep.subr.mxu0 0.0
    %228 = vmatpush1.xpose.msra.mxu0 0.0
    %229 = vmatprep.subr.mxu0 0.0
    %230 = vmatpush1.xpose.msra.mxu0 0.0
    %231 = vmatprep.subr.mxu0 0.0
    %232 = vmatpush1.xpose.msra.mxu0 0.0
    %233 = vmatprep.subr.mxu0 0.0
    %234 = vmatpush1.xpose.msra.mxu0 0.0
    %235 = vmatprep.subr.mxu0 0.0
    %236 = vmatpush1.xpose.msra.mxu0 0.0
    %237 = vmatprep.subr.mxu0 0.0
    %238 = vmatpush1.xpose.msra.mxu0 %v131
    %239 = vmatprep.subr.mxu0 0.0
    %240 = vmatpush2.xpose.msra.mxu0 0.0
    %241 = vmatprep.subr.mxu0 0.0
    %242 = vmatpush2.xpose.msra.mxu0 0.0
    %243 = vmatprep.subr.mxu0 0.0
    %244 = vmatpush2.xpose.msra.mxu0 0.0
    %245 = vmatprep.subr.mxu0 0.0
    %246 = vmatpush2.xpose.msra.mxu0 0.0
    %247 = vmatprep.subr.mxu0 0.0
    %248 = vmatpush2.xpose.msra.mxu0 0.0
    %249 = vmatprep.subr.mxu0 0.0
    %250 = vmatpush2.xpose.msra.mxu0 0.0
    %251 = vmatprep.subr.mxu0 0.0
    %252 = vmatpush2.xpose.msra.mxu0 0.0
    %253 = vmatprep.subr.mxu0 0.0
    %254 = vmatpush2.xpose.msra.mxu0 0.0
    %255 = vmatprep.subr.mxu0 0.0
    %256 = vmatpush2.xpose.msra.mxu0 0.0
    %257 = vmatprep.subr.mxu0 0.0
    %258 = vmatpush2.xpose.msra.mxu0 0.0
    %259 = vmatprep.subr.mxu0 0.0
    %260 = vmatpush2.xpose.msra.mxu0 0.0
    %261 = vmatprep.subr.mxu0 0.0
    %262 = vmatpush2.xpose.msra.mxu0 0.0
    %263 = vmatprep.subr.mxu0 0.0
    %264 = vmatpush2.xpose.msra.mxu0 0.0
    %265 = vmatprep.subr.mxu0 0.0
    %266 = vmatpush2.xpose.msra.mxu0 0.0
    %267 = vmatprep.subr.mxu0 0.0
    %268 = vmatpush2.xpose.msra.mxu0 0.0
    %269 = vmatprep.subr.mxu0 0.0
    %270 = vmatpush2.xpose.msra.mxu0 0.0
    %271 = vmatprep.mubr.f32.mxu0 0.0
    %272 = vmatmul.mubr.f32.gmra.mxu0 %v205
    %v273 = vpop.f32.mrf.mxu0
    %v274 = vadd.f32 0.0, %v273
    %v275 = vpop.f32.mrf.mxu0
    %276 = vdwg.mxu0
    %278 = vset.pattern.permute.xlu0 0
    %279 = vperm.xlu0 %278, %v200
    %v280 = vpop.permute.xlu0 %279
    %v282 = vlaneseq
    %v283 = vshrl.u32 %v282, 7
    %v284 = vsub.s32 0, %v283
    %v285 = vrot.slane %v274, %v284
    %v286 = vadd.f32 %v280, %v285
    %vm287 = vcmp.gt.f32.partialorder %v286, 0.0
    %v288 = vmul.f32 %v286, 0.2
    %v289 = vsel %vm287, %v286, %v288
    %vm290 = vcmask 36864
    %v291 = vsel %vm290, %v289, -inf
    %292 = vmax.xlane.f32.xlu0 %v291
    %v293 = vpop.xlane.xlu0 %292
    %v294 = vsub.f32 %v289, %v293
    %v295 = vmul.f32 %v294, 1.442695
    %v296 = vpow.pop %v295
    %v297 = vsel %vm44, %v296, 0.0
    %v298 = vsel %vm290, %v297, 0.0
    %299 = vadd.xlane.f32.xlu0 %v298
    %v300 = vpop.xlane.xlu0 %299
    %v301 = vrcp.pop %v300
    %v302 = vmul.f32 %v297, %v301
    %v303 = vld [vmem:[%s5] sm:$0x1]
    %v304 = vlaneseq
    %v305 = vshrl.u32 %v304, 7
    %v306 = vsub.s32 0, %v305
    %v307 = vrot.slane %v303, %v306
    %vm308 = vcmask 39936
    %v310 = vsel %vm308, %v302, 0
    %vm312 = vcmask 1044480
    %v313 = vsel %vm312, %v118, 0
    %315 = vmatprep.subr.mxu0 0.0
    %316 = vmatpush1.msra.mxu0 0.0
    %317 = vmatprep.subr.mxu0 0.0
    %318 = vmatpush1.msra.mxu0 0.0
    %319 = vmatprep.subr.mxu0 0.0
    %320 = vmatpush1.msra.mxu0 0.0
    %321 = vmatprep.subr.mxu0 0.0
    %322 = vmatpush1.msra.mxu0 0.0
    %323 = vmatprep.subr.mxu0 0.0
    %324 = vmatpush1.msra.mxu0 0.0
    %325 = vmatprep.subr.mxu0 0.0
    %326 = vmatpush1.msra.mxu0 0.0
    %327 = vmatprep.subr.mxu0 0.0
    %328 = vmatpush1.msra.mxu0 0.0
    %329 = vmatprep.subr.mxu0 0.0
    %330 = vmatpush1.msra.mxu0 0.0
    %331 = vmatprep.subr.mxu0 0.0
    %332 = vmatpush1.msra.mxu0 0.0
    %333 = vmatprep.subr.mxu0 0.0
    %334 = vmatpush1.msra.mxu0 0.0
    %335 = vmatprep.subr.mxu0 0.0
    %336 = vmatpush1.msra.mxu0 0.0
    %337 = vmatprep.subr.mxu0 0.0
    %338 = vmatpush1.msra.mxu0 0.0
    %339 = vmatprep.subr.mxu0 0.0
    %340 = vmatpush1.msra.mxu0 0.0
    %341 = vmatprep.subr.mxu0 0.0
    %342 = vmatpush1.msra.mxu0 0.0
    %343 = vmatprep.subr.mxu0 0.0
    %344 = vmatpush1.msra.mxu0 0.0
    %345 = vmatprep.subr.mxu0 0.0
    %346 = vmatpush1.msra.mxu0 %v313
    %347 = vmatprep.subr.mxu0 0.0
    %348 = vmatpush2.msra.mxu0 0.0
    %349 = vmatprep.subr.mxu0 0.0
    %350 = vmatpush2.msra.mxu0 0.0
    %351 = vmatprep.subr.mxu0 0.0
    %352 = vmatpush2.msra.mxu0 0.0
    %353 = vmatprep.subr.mxu0 0.0
    %354 = vmatpush2.msra.mxu0 0.0
    %355 = vmatprep.subr.mxu0 0.0
    %356 = vmatpush2.msra.mxu0 0.0
    %357 = vmatprep.subr.mxu0 0.0
    %358 = vmatpush2.msra.mxu0 0.0
    %359 = vmatprep.subr.mxu0 0.0
    %360 = vmatpush2.msra.mxu0 0.0
    %361 = vmatprep.subr.mxu0 0.0
    %362 = vmatpush2.msra.mxu0 0.0
    %363 = vmatprep.subr.mxu0 0.0
    %364 = vmatpush2.msra.mxu0 0.0
    %365 = vmatprep.subr.mxu0 0.0
    %366 = vmatpush2.msra.mxu0 0.0
    %367 = vmatprep.subr.mxu0 0.0
    %368 = vmatpush2.msra.mxu0 0.0
    %369 = vmatprep.subr.mxu0 0.0
    %370 = vmatpush2.msra.mxu0 0.0
    %371 = vmatprep.subr.mxu0 0.0
    %372 = vmatpush2.msra.mxu0 0.0
    %373 = vmatprep.subr.mxu0 0.0
    %374 = vmatpush2.msra.mxu0 0.0
    %375 = vmatprep.subr.mxu0 0.0
    %376 = vmatpush2.msra.mxu0 0.0
    %377 = vmatprep.subr.mxu0 0.0
    %378 = vmatpush2.msra.mxu0 0.0
    %379 = vmatprep.mubr.f32.mxu0 0.0
    %380 = vmatmul.mubr.f32.gmra.mxu0 %v310
    %v381 = vpop.f32.mrf.mxu0
    %v382 = vadd.f32 %v307, %v381
    %v383 = vpop.f32.mrf.mxu0
    %384 = vdwg.mxu0
    %v385 = vmax.f32 %v382, 0.0
    %v386 = vld [vmem:[%s6] sm:$0xff]
    %v387 = vld [vmem:[%s6 + $0x8] sm:$0xff]
    %v388 = vld [vmem:[%s6 + $0x10] sm:$0xff]
    %v389 = vld [vmem:[%s6 + $0x18] sm:$0xff]
    %390 = vset.pattern.permute.xlu0 1
    %391 = vperm.xlu0 %390, %v200
    %v392 = vpop.permute.xlu0 %391
    %v394 = vlaneseq
    %v395 = vshrl.u32 %v394, 7
    %v396 = vsub.s32 1, %v395
    %v397 = vrot.slane %v274, %v396
    %v398 = vadd.f32 %v392, %v397
    %vm399 = vcmp.gt.f32.partialorder %v398, 0.0
    %v400 = vmul.f32 %v398, 0.2
    %v401 = vsel %vm399, %v398, %v400
    %v402 = vsel %vm290, %v401, -inf
    %403 = vmax.xlane.f32.xlu0 %v402
    %v404 = vpop.xlane.xlu0 %403
    %v405 = vsub.f32 %v401, %v404
    %v406 = vmul.f32 %v405, 1.442695
    %v407 = vpow.pop %v406
    %v408 = vsel %vm44, %v407, 0.0
    %v409 = vsel %vm290, %v408, 0.0
    %410 = vadd.xlane.f32.xlu0 %v409
    %v411 = vpop.xlane.xlu0 %410
    %v412 = vrcp.pop %v411
    %v413 = vmul.f32 %v408, %v412
    %v414 = vld [vmem:[%s5 + $0x1] sm:$0x1]
    %v415 = vlaneseq
    %v416 = vshrl.u32 %v415, 7
    %v417 = vsub.s32 0, %v416
    %v418 = vrot.slane %v414, %v417
    %419 = vrot.lane.b32.xlu0 %v118, 96
    %v420 = vpop.permute.xlu0 %419
    %v422 = vsel %vm308, %v413, 0
    %v424 = vsel %vm312, %v420, 0
    %426 = vmatprep.subr.mxu0 0.0
    %427 = vmatpush1.msra.mxu0 0.0
    %428 = vmatprep.subr.mxu0 0.0
    %429 = vmatpush1.msra.mxu0 0.0
    %430 = vmatprep.subr.mxu0 0.0
    %431 = vmatpush1.msra.mxu0 0.0
    %432 = vmatprep.subr.mxu0 0.0
    %433 = vmatpush1.msra.mxu0 0.0
    %434 = vmatprep.subr.mxu0 0.0
    %435 = vmatpush1.msra.mxu0 0.0
    %436 = vmatprep.subr.mxu0 0.0
    %437 = vmatpush1.msra.mxu0 0.0
    %438 = vmatprep.subr.mxu0 0.0
    %439 = vmatpush1.msra.mxu0 0.0
    %440 = vmatprep.subr.mxu0 0.0
    %441 = vmatpush1.msra.mxu0 0.0
    %442 = vmatprep.subr.mxu0 0.0
    %443 = vmatpush1.msra.mxu0 0.0
    %444 = vmatprep.subr.mxu0 0.0
    %445 = vmatpush1.msra.mxu0 0.0
    %446 = vmatprep.subr.mxu0 0.0
    %447 = vmatpush1.msra.mxu0 0.0
    %448 = vmatprep.subr.mxu0 0.0
    %449 = vmatpush1.msra.mxu0 0.0
    %450 = vmatprep.subr.mxu0 0.0
    %451 = vmatpush1.msra.mxu0 0.0
    %452 = vmatprep.subr.mxu0 0.0
    %453 = vmatpush1.msra.mxu0 0.0
    %454 = vmatprep.subr.mxu0 0.0
    %455 = vmatpush1.msra.mxu0 0.0
    %456 = vmatprep.subr.mxu0 0.0
    %457 = vmatpush1.msra.mxu0 %v424
    %458 = vmatprep.subr.mxu0 0.0
    %459 = vmatpush2.msra.mxu0 0.0
    %460 = vmatprep.subr.mxu0 0.0
    %461 = vmatpush2.msra.mxu0 0.0
    %462 = vmatprep.subr.mxu0 0.0
    %463 = vmatpush2.msra.mxu0 0.0
    %464 = vmatprep.subr.mxu0 0.0
    %465 = vmatpush2.msra.mxu0 0.0
    %466 = vmatprep.subr.mxu0 0.0
    %467 = vmatpush2.msra.mxu0 0.0
    %468 = vmatprep.subr.mxu0 0.0
    %469 = vmatpush2.msra.mxu0 0.0
    %470 = vmatprep.subr.mxu0 0.0
    %471 = vmatpush2.msra.mxu0 0.0
    %472 = vmatprep.subr.mxu0 0.0
    %473 = vmatpush2.msra.mxu0 0.0
    %474 = vmatprep.subr.mxu0 0.0
    %475 = vmatpush2.msra.mxu0 0.0
    %476 = vmatprep.subr.mxu0 0.0
    %477 = vmatpush2.msra.mxu0 0.0
    %478 = vmatprep.subr.mxu0 0.0
    %479 = vmatpush2.msra.mxu0 0.0
    %480 = vmatprep.subr.mxu0 0.0
    %481 = vmatpush2.msra.mxu0 0.0
    %482 = vmatprep.subr.mxu0 0.0
    %483 = vmatpush2.msra.mxu0 0.0
    %484 = vmatprep.subr.mxu0 0.0
    %485 = vmatpush2.msra.mxu0 0.0
    %486 = vmatprep.subr.mxu0 0.0
    %487 = vmatpush2.msra.mxu0 0.0
    %488 = vmatprep.subr.mxu0 0.0
    %489 = vmatpush2.msra.mxu0 0.0
    %490 = vmatprep.mubr.f32.mxu0 0.0
    %491 = vmatmul.mubr.f32.gmra.mxu0 %v422
    %v492 = vpop.f32.mrf.mxu0
    %v493 = vadd.f32 %v418, %v492
    %v494 = vpop.f32.mrf.mxu0
    %495 = vdwg.mxu0
    %v496 = vmax.f32 %v493, 0.0
    %s497 = scalar_lea.vmem %s6, 32
    %v498 = vld [vmem:[%s497] sm:$0xff]
    %v499 = vld [vmem:[%s497 + $0x8] sm:$0xff]
    %v500 = vld [vmem:[%s497 + $0x10] sm:$0xff]
    %v501 = vld [vmem:[%s497 + $0x18] sm:$0xff]
    %vm502 = vcmask 261120
    %v504 = vsel %vm502, %v496, 0
    %506 = vmatprep.subr.mxu0 0.0
    %507 = vmatpush1.msra.mxu0 0.0
    %508 = vmatprep.subr.mxu0 0.0
    %509 = vmatpush1.msra.mxu0 0.0
    %510 = vmatprep.subr.mxu0 0.0
    %511 = vmatpush1.msra.mxu0 0.0
    %512 = vmatprep.subr.mxu0 0.0
    %513 = vmatpush1.msra.mxu0 0.0
    %514 = vmatprep.subr.mxu0 0.0
    %515 = vmatpush1.msra.mxu0 0.0
    %516 = vmatprep.subr.mxu0 0.0
    %517 = vmatpush1.msra.mxu0 0.0
    %518 = vmatprep.subr.mxu0 0.0
    %519 = vmatpush1.msra.mxu0 0.0
    %520 = vmatprep.subr.mxu0 0.0
    %521 = vmatpush1.msra.mxu0 0.0
    %522 = vmatprep.subr.mxu0 0.0
    %523 = vmatpush1.msra.mxu0 0.0
    %524 = vmatprep.subr.mxu0 0.0
    %525 = vmatpush1.msra.mxu0 0.0
    %526 = vmatprep.subr.mxu0 0.0
    %527 = vmatpush1.msra.mxu0 0.0
    %528 = vmatprep.subr.mxu0 0.0
    %529 = vmatpush1.msra.mxu0 0.0
    %530 = vmatprep.subr.mxu0 0.0
    %531 = vmatpush1.msra.mxu0 %v501
    %532 = vmatprep.subr.mxu0 0.0
    %533 = vmatpush1.msra.mxu0 %v500
    %534 = vmatprep.subr.mxu0 0.0
    %535 = vmatpush1.msra.mxu0 %v499
    %536 = vmatprep.subr.mxu0 0.0
    %537 = vmatpush1.msra.mxu0 %v498
    %538 = vmatprep.subr.mxu0 0.0
    %539 = vmatpush2.msra.mxu0 0.0
    %540 = vmatprep.subr.mxu0 0.0
    %541 = vmatpush2.msra.mxu0 0.0
    %542 = vmatprep.subr.mxu0 0.0
    %543 = vmatpush2.msra.mxu0 0.0
    %544 = vmatprep.subr.mxu0 0.0
    %545 = vmatpush2.msra.mxu0 0.0
    %546 = vmatprep.subr.mxu0 0.0
    %547 = vmatpush2.msra.mxu0 0.0
    %548 = vmatprep.subr.mxu0 0.0
    %549 = vmatpush2.msra.mxu0 0.0
    %550 = vmatprep.subr.mxu0 0.0
    %551 = vmatpush2.msra.mxu0 0.0
    %552 = vmatprep.subr.mxu0 0.0
    %553 = vmatpush2.msra.mxu0 0.0
    %554 = vmatprep.subr.mxu0 0.0
    %555 = vmatpush2.msra.mxu0 0.0
    %556 = vmatprep.subr.mxu0 0.0
    %557 = vmatpush2.msra.mxu0 0.0
    %558 = vmatprep.subr.mxu0 0.0
    %559 = vmatpush2.msra.mxu0 0.0
    %560 = vmatprep.subr.mxu0 0.0
    %561 = vmatpush2.msra.mxu0 0.0
    %562 = vmatprep.subr.mxu0 0.0
    %563 = vmatpush2.msra.mxu0 0.0
    %564 = vmatprep.subr.mxu0 0.0
    %565 = vmatpush2.msra.mxu0 0.0
    %566 = vmatprep.subr.mxu0 0.0
    %567 = vmatpush2.msra.mxu0 0.0
    %568 = vmatprep.subr.mxu0 0.0
    %569 = vmatpush2.msra.mxu0 0.0
    %570 = vmatprep.mubr.f32.mxu0 0.0
    %571 = vmatmul.mubr.f32.gmra.mxu0 %v504
    %v572 = vpop.f32.mrf.mxu0
    %v573 = vadd.f32 0.0, %v572
    %v574 = vpop.f32.mrf.mxu0
    %575 = vdwg.mxu0
    %v577 = vsel %vm502, %v385, 0
    %579 = vmatprep.subr.mxu0 0.0
    %580 = vmatpush1.msra.mxu0 0.0
    %581 = vmatprep.subr.mxu0 0.0
    %582 = vmatpush1.msra.mxu0 0.0
    %583 = vmatprep.subr.mxu0 0.0
    %584 = vmatpush1.msra.mxu0 0.0
    %585 = vmatprep.subr.mxu0 0.0
    %586 = vmatpush1.msra.mxu0 0.0
    %587 = vmatprep.subr.mxu0 0.0
    %588 = vmatpush1.msra.mxu0 0.0
    %589 = vmatprep.subr.mxu0 0.0
    %590 = vmatpush1.msra.mxu0 0.0
    %591 = vmatprep.subr.mxu0 0.0
    %592 = vmatpush1.msra.mxu0 0.0
    %593 = vmatprep.subr.mxu0 0.0
    %594 = vmatpush1.msra.mxu0 0.0
    %595 = vmatprep.subr.mxu0 0.0
    %596 = vmatpush1.msra.mxu0 0.0
    %597 = vmatprep.subr.mxu0 0.0
    %598 = vmatpush1.msra.mxu0 0.0
    %599 = vmatprep.subr.mxu0 0.0
    %600 = vmatpush1.msra.mxu0 0.0
    %601 = vmatprep.subr.mxu0 0.0
    %602 = vmatpush1.msra.mxu0 0.0
    %603 = vmatprep.subr.mxu0 0.0
    %604 = vmatpush1.msra.mxu0 %v389
    %605 = vmatprep.subr.mxu0 0.0
    %606 = vmatpush1.msra.mxu0 %v388
    %607 = vmatprep.subr.mxu0 0.0
    %608 = vmatpush1.msra.mxu0 %v387
    %609 = vmatprep.subr.mxu0 0.0
    %610 = vmatpush1.msra.mxu0 %v386
    %611 = vmatprep.subr.mxu0 0.0
    %612 = vmatpush2.msra.mxu0 0.0
    %613 = vmatprep.subr.mxu0 0.0
    %614 = vmatpush2.msra.mxu0 0.0
    %615 = vmatprep.subr.mxu0 0.0
    %616 = vmatpush2.msra.mxu0 0.0
    %617 = vmatprep.subr.mxu0 0.0
    %618 = vmatpush2.msra.mxu0 0.0
    %619 = vmatprep.subr.mxu0 0.0
    %620 = vmatpush2.msra.mxu0 0.0
    %621 = vmatprep.subr.mxu0 0.0
    %622 = vmatpush2.msra.mxu0 0.0
    %623 = vmatprep.subr.mxu0 0.0
    %624 = vmatpush2.msra.mxu0 0.0
    %625 = vmatprep.subr.mxu0 0.0
    %626 = vmatpush2.msra.mxu0 0.0
    %627 = vmatprep.subr.mxu0 0.0
    %628 = vmatpush2.msra.mxu0 0.0
    %629 = vmatprep.subr.mxu0 0.0
    %630 = vmatpush2.msra.mxu0 0.0
    %631 = vmatprep.subr.mxu0 0.0
    %632 = vmatpush2.msra.mxu0 0.0
    %633 = vmatprep.subr.mxu0 0.0
    %634 = vmatpush2.msra.mxu0 0.0
    %635 = vmatprep.subr.mxu0 0.0
    %636 = vmatpush2.msra.mxu0 0.0
    %637 = vmatprep.subr.mxu0 0.0
    %638 = vmatpush2.msra.mxu0 0.0
    %639 = vmatprep.subr.mxu0 0.0
    %640 = vmatpush2.msra.mxu0 0.0
    %641 = vmatprep.subr.mxu0 0.0
    %642 = vmatpush2.msra.mxu0 0.0
    %643 = vmatprep.mubr.f32.mxu0 0.0
    %644 = vmatmul.mubr.f32.gmra.mxu0 %v577
    %v645 = vpop.f32.mrf.mxu0
    %v646 = vadd.f32 %v573, %v645
    %v647 = vpop.f32.mrf.mxu0
    %648 = vdwg.mxu0
    %v649 = vld [vmem:[%s7] sm:$0x1]
    %v650 = vld [vmem:[%s7 + $0x1] sm:$0x1]
    %v651 = vld [vmem:[%s7 + $0x2] sm:$0x1]
    %v652 = vld [vmem:[%s7 + $0x3] sm:$0x1]
    %v653 = vlaneseq
    %v654 = vshrl.u32 %v653, 7
    %v655 = vsub.s32 0, %v654
    %v656 = vrot.slane %v649, %v655
    %v657 = vmul.f32 %v646, %v656
    %vm658 = vcmask 159744
    %v659 = vsel %vm658, %v657, 0.0
    %660 = vadd.xlane.f32.xlu0 %v659
    %v661 = vpop.xlane.xlu0 %660
    %vm662 = vcmask 162816
    %v664 = vsel %vm662, %v650, 0
    %v667 = vsel %vm662, %v646, 0
    %669 = vmatprep.subr.mxu0 0.0
    %670 = vmatpush1.xpose.msra.mxu0 0.0
    %671 = vmatprep.subr.mxu0 0.0
    %672 = vmatpush1.xpose.msra.mxu0 0.0
    %673 = vmatprep.subr.mxu0 0.0
    %674 = vmatpush1.xpose.msra.mxu0 0.0
    %675 = vmatprep.subr.mxu0 0.0
    %676 = vmatpush1.xpose.msra.mxu0 0.0
    %677 = vmatprep.subr.mxu0 0.0
    %678 = vmatpush1.xpose.msra.mxu0 0.0
    %679 = vmatprep.subr.mxu0 0.0
    %680 = vmatpush1.xpose.msra.mxu0 0.0
    %681 = vmatprep.subr.mxu0 0.0
    %682 = vmatpush1.xpose.msra.mxu0 0.0
    %683 = vmatprep.subr.mxu0 0.0
    %684 = vmatpush1.xpose.msra.mxu0 0.0
    %685 = vmatprep.subr.mxu0 0.0
    %686 = vmatpush1.xpose.msra.mxu0 0.0
    %687 = vmatprep.subr.mxu0 0.0
    %688 = vmatpush1.xpose.msra.mxu0 0.0
    %689 = vmatprep.subr.mxu0 0.0
    %690 = vmatpush1.xpose.msra.mxu0 0.0
    %691 = vmatprep.subr.mxu0 0.0
    %692 = vmatpush1.xpose.msra.mxu0 0.0
    %693 = vmatprep.subr.mxu0 0.0
    %694 = vmatpush1.xpose.msra.mxu0 0.0
    %695 = vmatprep.subr.mxu0 0.0
    %696 = vmatpush1.xpose.msra.mxu0 0.0
    %697 = vmatprep.subr.mxu0 0.0
    %698 = vmatpush1.xpose.msra.mxu0 0.0
    %699 = vmatprep.subr.mxu0 0.0
    %700 = vmatpush1.xpose.msra.mxu0 %v667
    %701 = vmatprep.subr.mxu0 0.0
    %702 = vmatpush2.xpose.msra.mxu0 0.0
    %703 = vmatprep.subr.mxu0 0.0
    %704 = vmatpush2.xpose.msra.mxu0 0.0
    %705 = vmatprep.subr.mxu0 0.0
    %706 = vmatpush2.xpose.msra.mxu0 0.0
    %707 = vmatprep.subr.mxu0 0.0
    %708 = vmatpush2.xpose.msra.mxu0 0.0
    %709 = vmatprep.subr.mxu0 0.0
    %710 = vmatpush2.xpose.msra.mxu0 0.0
    %711 = vmatprep.subr.mxu0 0.0
    %712 = vmatpush2.xpose.msra.mxu0 0.0
    %713 = vmatprep.subr.mxu0 0.0
    %714 = vmatpush2.xpose.msra.mxu0 0.0
    %715 = vmatprep.subr.mxu0 0.0
    %716 = vmatpush2.xpose.msra.mxu0 0.0
    %717 = vmatprep.subr.mxu0 0.0
    %718 = vmatpush2.xpose.msra.mxu0 0.0
    %719 = vmatprep.subr.mxu0 0.0
    %720 = vmatpush2.xpose.msra.mxu0 0.0
    %721 = vmatprep.subr.mxu0 0.0
    %722 = vmatpush2.xpose.msra.mxu0 0.0
    %723 = vmatprep.subr.mxu0 0.0
    %724 = vmatpush2.xpose.msra.mxu0 0.0
    %725 = vmatprep.subr.mxu0 0.0
    %726 = vmatpush2.xpose.msra.mxu0 0.0
    %727 = vmatprep.subr.mxu0 0.0
    %728 = vmatpush2.xpose.msra.mxu0 0.0
    %729 = vmatprep.subr.mxu0 0.0
    %730 = vmatpush2.xpose.msra.mxu0 0.0
    %731 = vmatprep.subr.mxu0 0.0
    %732 = vmatpush2.xpose.msra.mxu0 0.0
    %733 = vmatprep.mubr.f32.mxu0 0.0
    %734 = vmatmul.mubr.f32.gmra.mxu0 %v664
    %v735 = vpop.f32.mrf.mxu0
    %v736 = vadd.f32 0.0, %v735
    %v737 = vpop.f32.mrf.mxu0
    %738 = vdwg.mxu0
    %v739 = vlaneseq
    %v740 = vshrl.u32 %v739, 7
    %v741 = vsub.s32 0, %v740
    %v742 = vrot.slane %v736, %v741
    %v743 = vadd.f32 %v661, %v742
    %vm744 = vcmp.gt.f32.partialorder %v743, 0.0
    %v745 = vmul.f32 %v743, 0.2
    %v746 = vsel %vm744, %v743, %v745
    %v747 = vsel %vm290, %v746, -inf
    %748 = vmax.xlane.f32.xlu0 %v747
    %v749 = vpop.xlane.xlu0 %748
    %v750 = vsub.f32 %v746, %v749
    %v751 = vmul.f32 %v750, 1.442695
    %v752 = vpow.pop %v751
    %v753 = vsel %vm44, %v752, 0.0
    %v754 = vsel %vm290, %v753, 0.0
    %755 = vadd.xlane.f32.xlu0 %v754
    %v756 = vpop.xlane.xlu0 %755
    %v757 = vrcp.pop %v756
    %v758 = vmul.f32 %v753, %v757
    %v759 = vlaneseq
    %v760 = vshrl.u32 %v759, 7
    %v761 = vsub.s32 0, %v760
    %v762 = vrot.slane %v651, %v761
    %v764 = vsel %vm308, %v758, 0
    %v766 = vsel %vm312, %v646, 0
    %768 = vmatprep.subr.mxu0 0.0
    %769 = vmatpush1.msra.mxu0 0.0
    %770 = vmatprep.subr.mxu0 0.0
    %771 = vmatpush1.msra.mxu0 0.0
    %772 = vmatprep.subr.mxu0 0.0
    %773 = vmatpush1.msra.mxu0 0.0
    %774 = vmatprep.subr.mxu0 0.0
    %775 = vmatpush1.msra.mxu0 0.0
    %776 = vmatprep.subr.mxu0 0.0
    %777 = vmatpush1.msra.mxu0 0.0
    %778 = vmatprep.subr.mxu0 0.0
    %779 = vmatpush1.msra.mxu0 0.0
    %780 = vmatprep.subr.mxu0 0.0
    %781 = vmatpush1.msra.mxu0 0.0
    %782 = vmatprep.subr.mxu0 0.0
    %783 = vmatpush1.msra.mxu0 0.0
    %784 = vmatprep.subr.mxu0 0.0
    %785 = vmatpush1.msra.mxu0 0.0
    %786 = vmatprep.subr.mxu0 0.0
    %787 = vmatpush1.msra.mxu0 0.0
    %788 = vmatprep.subr.mxu0 0.0
    %789 = vmatpush1.msra.mxu0 0.0
    %790 = vmatprep.subr.mxu0 0.0
    %791 = vmatpush1.msra.mxu0 0.0
    %792 = vmatprep.subr.mxu0 0.0
    %793 = vmatpush1.msra.mxu0 0.0
    %794 = vmatprep.subr.mxu0 0.0
    %795 = vmatpush1.msra.mxu0 0.0
    %796 = vmatprep.subr.mxu0 0.0
    %797 = vmatpush1.msra.mxu0 0.0
    %798 = vmatprep.subr.mxu0 0.0
    %799 = vmatpush1.msra.mxu0 %v766
    %800 = vmatprep.subr.mxu0 0.0
    %801 = vmatpush2.msra.mxu0 0.0
    %802 = vmatprep.subr.mxu0 0.0
    %803 = vmatpush2.msra.mxu0 0.0
    %804 = vmatprep.subr.mxu0 0.0
    %805 = vmatpush2.msra.mxu0 0.0
    %806 = vmatprep.subr.mxu0 0.0
    %807 = vmatpush2.msra.mxu0 0.0
    %808 = vmatprep.subr.mxu0 0.0
    %809 = vmatpush2.msra.mxu0 0.0
    %810 = vmatprep.subr.mxu0 0.0
    %811 = vmatpush2.msra.mxu0 0.0
    %812 = vmatprep.subr.mxu0 0.0
    %813 = vmatpush2.msra.mxu0 0.0
    %814 = vmatprep.subr.mxu0 0.0
    %815 = vmatpush2.msra.mxu0 0.0
    %816 = vmatprep.subr.mxu0 0.0
    %817 = vmatpush2.msra.mxu0 0.0
    %818 = vmatprep.subr.mxu0 0.0
    %819 = vmatpush2.msra.mxu0 0.0
    %820 = vmatprep.subr.mxu0 0.0
    %821 = vmatpush2.msra.mxu0 0.0
    %822 = vmatprep.subr.mxu0 0.0
    %823 = vmatpush2.msra.mxu0 0.0
    %824 = vmatprep.subr.mxu0 0.0
    %825 = vmatpush2.msra.mxu0 0.0
    %826 = vmatprep.subr.mxu0 0.0
    %827 = vmatpush2.msra.mxu0 0.0
    %828 = vmatprep.subr.mxu0 0.0
    %829 = vmatpush2.msra.mxu0 0.0
    %830 = vmatprep.subr.mxu0 0.0
    %831 = vmatpush2.msra.mxu0 0.0
    %832 = vmatprep.mubr.f32.mxu0 0.0
    %833 = vmatmul.mubr.f32.gmra.mxu0 %v764
    %v834 = vpop.f32.mrf.mxu0
    %v835 = vadd.f32 %v762, %v834
    %v836 = vpop.f32.mrf.mxu0
    %837 = vdwg.mxu0
    %v838 = vsel %vm658, %v835, 0.0
    %v839 = vrot.slane %v838, 4
    %v840 = vadd.f32 %v838, %v839
    %v841 = vrot.slane %v840, 2
    %v842 = vadd.f32 %v840, %v841
    %v843 = vrot.slane %v842, 1
    %v844 = vadd.f32 %v842, %v843
    %v845 = vmul.f32 %v844, 0.2
    %v846 = vld [vmem:[%s8] sm:$0xff]
    %v847 = vld [vmem:[%s8 + $0x8] sm:$0xff]
    %v848 = vld [vmem:[%s8 + $0x10] sm:$0xf]
    %v849 = vld [vmem:[%s9] sm:$0x1]
    %v851 = vsel %vm662, %v845, 0
    %vm853 = vcmask 1043456
    %v855 = vsel %vm853, %v848, 0
    %857 = vmatprep.subr.mxu0 0.0
    %858 = vmatpush1.msra.mxu0 0.0
    %859 = vmatprep.subr.mxu0 0.0
    %860 = vmatpush1.msra.mxu0 0.0
    %861 = vmatprep.subr.mxu0 0.0
    %862 = vmatpush1.msra.mxu0 0.0
    %863 = vmatprep.subr.mxu0 0.0
    %864 = vmatpush1.msra.mxu0 0.0
    %865 = vmatprep.subr.mxu0 0.0
    %866 = vmatpush1.msra.mxu0 0.0
    %867 = vmatprep.subr.mxu0 0.0
    %868 = vmatpush1.msra.mxu0 0.0
    %869 = vmatprep.subr.mxu0 0.0
    %870 = vmatpush1.msra.mxu0 0.0
    %871 = vmatprep.subr.mxu0 0.0
    %872 = vmatpush1.msra.mxu0 0.0
    %873 = vmatprep.subr.mxu0 0.0
    %874 = vmatpush1.msra.mxu0 0.0
    %875 = vmatprep.subr.mxu0 0.0
    %876 = vmatpush1.msra.mxu0 0.0
    %877 = vmatprep.subr.mxu0 0.0
    %878 = vmatpush1.msra.mxu0 0.0
    %879 = vmatprep.subr.mxu0 0.0
    %880 = vmatpush1.msra.mxu0 0.0
    %881 = vmatprep.subr.mxu0 0.0
    %882 = vmatpush1.msra.mxu0 0.0
    %883 = vmatprep.subr.mxu0 0.0
    %884 = vmatpush1.msra.mxu0 %v855
    %885 = vmatprep.subr.mxu0 0.0
    %886 = vmatpush1.msra.mxu0 %v847
    %887 = vmatprep.subr.mxu0 0.0
    %888 = vmatpush1.msra.mxu0 %v846
    %889 = vmatprep.subr.mxu0 0.0
    %890 = vmatpush2.msra.mxu0 0.0
    %891 = vmatprep.subr.mxu0 0.0
    %892 = vmatpush2.msra.mxu0 0.0
    %893 = vmatprep.subr.mxu0 0.0
    %894 = vmatpush2.msra.mxu0 0.0
    %895 = vmatprep.subr.mxu0 0.0
    %896 = vmatpush2.msra.mxu0 0.0
    %897 = vmatprep.subr.mxu0 0.0
    %898 = vmatpush2.msra.mxu0 0.0
    %899 = vmatprep.subr.mxu0 0.0
    %900 = vmatpush2.msra.mxu0 0.0
    %901 = vmatprep.subr.mxu0 0.0
    %902 = vmatpush2.msra.mxu0 0.0
    %903 = vmatprep.subr.mxu0 0.0
    %904 = vmatpush2.msra.mxu0 0.0
    %905 = vmatprep.subr.mxu0 0.0
    %906 = vmatpush2.msra.mxu0 0.0
    %907 = vmatprep.subr.mxu0 0.0
    %908 = vmatpush2.msra.mxu0 0.0
    %909 = vmatprep.subr.mxu0 0.0
    %910 = vmatpush2.msra.mxu0 0.0
    %911 = vmatprep.subr.mxu0 0.0
    %912 = vmatpush2.msra.mxu0 0.0
    %913 = vmatprep.subr.mxu0 0.0
    %914 = vmatpush2.msra.mxu0 0.0
    %915 = vmatprep.subr.mxu0 0.0
    %916 = vmatpush2.msra.mxu0 0.0
    %917 = vmatprep.subr.mxu0 0.0
    %918 = vmatpush2.msra.mxu0 0.0
    %919 = vmatprep.subr.mxu0 0.0
    %920 = vmatpush2.msra.mxu0 0.0
    %921 = vmatprep.mubr.f32.mxu0 0.0
    %922 = vmatmul.mubr.f32.gmra.mxu0 %v851
    %v923 = vpop.f32.mrf.mxu0
    %v924 = vadd.f32 %v849, %v923
    %v925 = vpop.f32.mrf.mxu0
    %926 = vdwg.mxu0
    %v927 = vtanh.pop %v924
    %v928 = vld [vmem:[%s10] sm:$0xff]
    %v929 = vld [vmem:[%s10 + $0x8] sm:$0xff]
    %v930 = vld [vmem:[%s10 + $0x10] sm:$0xff]
    %v931 = vld [vmem:[%s10 + $0x18] sm:$0xff]
    %v932 = vld [vmem:[%s10 + $0x20] sm:$0xff]
    %v933 = vld [vmem:[%s10 + $0x28] sm:$0xff]
    %v934 = vld [vmem:[%s10 + $0x30] sm:$0xff]
    %v935 = vld [vmem:[%s10 + $0x38] sm:$0xff]
    %v936 = vld [vmem:[%s10 + $0x40] sm:$0xff]
    %v937 = vld [vmem:[%s10 + $0x48] sm:$0xff]
    %v938 = vld [vmem:[%s10 + $0x50] sm:$0xff]
    %v939 = vld [vmem:[%s10 + $0x58] sm:$0xff]
    %v940 = vld [vmem:[%s10 + $0x60] sm:$0xff]
    %v941 = vld [vmem:[%s10 + $0x68] sm:$0xff]
    %v942 = vld [vmem:[%s10 + $0x70] sm:$0xff]
    %v943 = vld [vmem:[%s10 + $0x78] sm:$0xff]
    %944 = vmatprep.subr.mxu0 0.0
    %945 = vmatpush1.msra.mxu0 %v943
    %946 = vmatprep.subr.mxu0 0.0
    %947 = vmatpush1.msra.mxu0 %v942
    %948 = vmatprep.subr.mxu0 0.0
    %949 = vmatpush1.msra.mxu0 %v941
    %950 = vmatprep.subr.mxu0 0.0
    %951 = vmatpush1.msra.mxu0 %v940
    %952 = vmatprep.subr.mxu0 0.0
    %953 = vmatpush1.msra.mxu0 %v939
    %954 = vmatprep.subr.mxu0 0.0
    %955 = vmatpush1.msra.mxu0 %v938
    %956 = vmatprep.subr.mxu0 0.0
    %957 = vmatpush1.msra.mxu0 %v937
    %958 = vmatprep.subr.mxu0 0.0
    %959 = vmatpush1.msra.mxu0 %v936
    %960 = vmatprep.subr.mxu0 0.0
    %961 = vmatpush1.msra.mxu0 %v935
    %962 = vmatprep.subr.mxu0 0.0
    %963 = vmatpush1.msra.mxu0 %v934
    %964 = vmatprep.subr.mxu0 0.0
    %965 = vmatpush1.msra.mxu0 %v933
    %966 = vmatprep.subr.mxu0 0.0
    %967 = vmatpush1.msra.mxu0 %v932
    %968 = vmatprep.subr.mxu0 0.0
    %969 = vmatpush1.msra.mxu0 %v931
    %970 = vmatprep.subr.mxu0 0.0
    %971 = vmatpush1.msra.mxu0 %v930
    %972 = vmatprep.subr.mxu0 0.0
    %973 = vmatpush1.msra.mxu0 %v929
    %974 = vmatprep.subr.mxu0 0.0
    %975 = vmatpush1.msra.mxu0 %v928
    %976 = vmatprep.subr.mxu0 0.0
    %977 = vmatpush2.msra.mxu0 0.0
    %978 = vmatprep.subr.mxu0 0.0
    %979 = vmatpush2.msra.mxu0 0.0
    %980 = vmatprep.subr.mxu0 0.0
    %981 = vmatpush2.msra.mxu0 0.0
    %982 = vmatprep.subr.mxu0 0.0
    %983 = vmatpush2.msra.mxu0 0.0
    %984 = vmatprep.subr.mxu0 0.0
    %985 = vmatpush2.msra.mxu0 0.0
    %986 = vmatprep.subr.mxu0 0.0
    %987 = vmatpush2.msra.mxu0 0.0
    %988 = vmatprep.subr.mxu0 0.0
    %989 = vmatpush2.msra.mxu0 0.0
    %990 = vmatprep.subr.mxu0 0.0
    %991 = vmatpush2.msra.mxu0 0.0
    %992 = vmatprep.subr.mxu0 0.0
    %993 = vmatpush2.msra.mxu0 0.0
    %994 = vmatprep.subr.mxu0 0.0
    %995 = vmatpush2.msra.mxu0 0.0
    %996 = vmatprep.subr.mxu0 0.0
    %997 = vmatpush2.msra.mxu0 0.0
    %998 = vmatprep.subr.mxu0 0.0
    %999 = vmatpush2.msra.mxu0 0.0
    %1000 = vmatprep.subr.mxu0 0.0
    %1001 = vmatpush2.msra.mxu0 0.0
    %1002 = vmatprep.subr.mxu0 0.0
    %1003 = vmatpush2.msra.mxu0 0.0
    %1004 = vmatprep.subr.mxu0 0.0
    %1005 = vmatpush2.msra.mxu0 0.0
    %1006 = vmatprep.subr.mxu0 0.0
    %1007 = vmatpush2.msra.mxu0 0.0
    %1008 = vmatprep.mubr.f32.mxu0 0.0
    %1009 = vmatmul.mubr.f32.gmra.mxu0 %v927
    %v1010 = vpop.f32.mrf.mxu0
    %v1011 = vadd.f32 %v652, %v1010
    %v1012 = vpop.f32.mrf.mxu0
    %1013 = vdwg.mxu0
    %vm1014 = vcmask 155648
    %v1015 = vsel %vm1014, %v1011, -inf
    %1016 = vmax.xlane.f32.xlu0 %v1015
    %v1017 = vpop.xlane.xlu0 %1016
    %v1018 = vsub.f32 %v1011, %v1017
    %v1019 = vmul.f32 %v1018, 1.442695
    %v1020 = vpow.pop %v1019
    %v1021 = vsel %vm1014, %v1020, 0.0
    %1022 = vadd.xlane.f32.xlu0 %v1021
    %v1023 = vpop.xlane.xlu0 %1022
    %v1024 = vlog2.pop %v1023
    %v1025 = vmul.f32 %v1024, 0.6931472
    %v1026 = vadd.f32 %v1017, %v1025
    %v1027 = vsub.f32 %v1011, %v1026
    %1028 = vst.msk [vmem:[#allocation2] sm:$0x1] %vm1014, %v1027
    %1029 = vst [vmem:[#allocation4] sm:$0x1] %v927
    // Predicated region
    $region46: #{tpu_custom_call.1} parent=1 // pred_check
      _
    $region47: #{tpu_custom_call.1} parent=1 // pred_check_branch
      %1031 = sbr.rel (0) target = $region49
    $region48: #{tpu_custom_call.1} parent=1 // pred_region
      %s1033 = ssub.s32 16, 16
      %1034 = vsyncadd [#allocation3], %s1033
      %s1036 = sshll.u32 [#allocation2], 4
      %s1037 = int_to_ptr.vmem [resolvable:$true] %s1036
      %1039 = dma.vmem_to_hbm [thread:$0]  %s1037, 16, %s11, [#allocation3]
    $region49: #{tpu_custom_call.1} parent=1 // pred_fallthru
      _
    // Predicated region
    $region50: #{tpu_custom_call.1} parent=1 // pred_check
      _
    $region51: #{tpu_custom_call.1} parent=1 // pred_check_branch
      %1041 = sbr.rel (0) target = $region53
    $region52: #{tpu_custom_call.1} parent=1 // pred_region
      %s1043 = ssub.s32 16, 16
      %1044 = vsyncadd [#allocation5], %s1043
      %s1046 = sshll.u32 [#allocation4], 4
      %s1047 = int_to_ptr.vmem [resolvable:$true] %s1046
      %1049 = dma.vmem_to_hbm [thread:$0]  %s1047, 16, %s12, [#allocation5]
    $region53: #{tpu_custom_call.1} parent=1 // pred_fallthru
      _
    // Predicated region
    $region54: #{tpu_custom_call.1} parent=1 // pred_check
      _
    $region55: #{tpu_custom_call.1} parent=1 // pred_check_branch
      %1051 = sbr.rel (0) target = $region57
    $region56: #{tpu_custom_call.1} parent=1 // pred_region
      %1052 = dma.done [#allocation3], 16
    $region57: #{tpu_custom_call.1} parent=1 // pred_fallthru
      _
    // Predicated region
    $region58: #{tpu_custom_call.1} parent=1 // pred_check
      _
    $region59: #{tpu_custom_call.1} parent=1 // pred_check_branch
      %1054 = sbr.rel (0) target = $region61
    $region60: #{tpu_custom_call.1} parent=1 // pred_region
      %1055 = dma.done [#allocation5], 16
    $region61: #{tpu_custom_call.1} parent=1 // pred_fallthru
      _
    %1056 = vsyncpa [#allocation3], 1
    %1057 = vsyncpa [#allocation5], 1

</llo_original>
